<compile_context>
chip_gen: v7x
topology: tpu7x:2x2x1
jax: 0.10.0
libtpu: 0.0.40
codegen_flags: <defaults>
</compile_context>

<pallas_src>
import jax
import jax.numpy as jnp
from jax.experimental import pallas as pl
from jax.experimental.pallas import tpu as pltpu


def _round_up(x, m):
    return (x + m - 1) // m * m


def mlp_kernel(x_ref, w1_ref, b1_ref, w2_ref, b2_ref, o_ref):
    # x arrives as f32 (no wrapper pad/cast); cast to bf16 here for the MXU.
    x = x_ref[...].astype(jnp.bfloat16)
    # L1 + ReLU: bf16 operands on the MXU, f32 accumulation. Biases stay f32.
    h = jnp.dot(x, w1_ref[...], preferred_element_type=jnp.float32)
    h = jnp.maximum(h + b1_ref[...], 0.0)
    # L2: cast activations back to bf16 so this matmul also runs at bf16 rate.
    z = jnp.dot(h.astype(jnp.bfloat16), w2_ref[...],
                preferred_element_type=jnp.float32)
    # NOTE: b2 carries -1e30 in padded output columns so their softmax weight
    # is exactly 0. This sentinel is only safe while the bias + accumulator
    # stay f32 (in bf16/f16 it becomes -inf and the max-subtract below could
    # produce NaN). Do not lower these dtypes.
    z = z + b2_ref[...]
    # Softmax over the last axis (== dim=1 of the (B, out_dim) output).
    z = z - jnp.max(z, axis=-1, keepdims=True)
    e = jnp.exp(z)
    # Exact f32 normalization (not approx reciprocal): rows sum to 1 exactly,
    # and the divide hides under the surrounding MXU/DMA slack.
    o_ref[...] = (e / jnp.sum(e, axis=-1, keepdims=True)).astype(o_ref.dtype)


def _vmem_capacity_bytes():
    try:
        return int(pltpu.get_tpu_info().vmem_capacity_bytes)
    except Exception:
        return 64 * 1024 * 1024  # conservative fallback (v7x per-TC VMEM)


def make_mlp(w1, b1, w2, b2):
    """Pad/cast the parameters ONCE and return a jitted forward function."""
    D_in, H = w1.shape
    H2, D_out = w2.shape
    assert H2 == H

    H_p = _round_up(H, 128)
    D_out_p = _round_up(D_out, 128)

    f32, bf16 = jnp.float32, jnp.bfloat16
    # Zero-padding of the hidden dim is exact: padded W1 columns get bias 0,
    # so ReLU(0)=0 contributes nothing to the second matmul.
    w1p = jnp.pad(w1, ((0, 0), (0, H_p - H))).astype(bf16)
    w2p = jnp.pad(w2, ((0, H_p - H), (0, D_out_p - D_out))).astype(bf16)
    b1p = jnp.pad(b1.reshape(1, -1).astype(f32), ((0, 0), (0, H_p - H)))
    # Padded output columns get a huge negative bias -> softmax weight == 0.
    b2p = jnp.pad(b2.reshape(1, -1).astype(f32),
                  ((0, 0), (0, D_out_p - D_out)), constant_values=-1e30)

    vmem_cap = _vmem_capacity_bytes()
    big_vmem = vmem_cap >= 96 * 1024 * 1024     # v5e/v6e (128 MiB) vs v7x (64 MiB)
    x_buffers = 3 if big_vmem else 2            # deeper x prefetch where VMEM is free
    tb_cap = 512 if big_vmem else 256

    # Single-buffered resident weights/biases (Buffered(1)).
    w_bytes = (w1p.size + w2p.size) * 2 + (b1p.size + b2p.size) * 4
    # TODO(synk): if 1x bf16 weights exceed the VMEM budget (very wide layers),
    # add a trailing "arbitrary" reduction grid axis over D_in/H with a
    # pl.when-gated f32 accumulator instead of keeping W1/W2 fully resident.
    assert w_bytes <= int(0.6 * vmem_cap), (
        "weights too large for the VMEM-resident kernel; K-split not implemented")

    @jax.jit
    def forward(x):
        B, d_in = x.shape
        assert d_in == D_in

        # ---- Batch tile derived from the per-generation VMEM budget. -------
        budget = int(0.75 * vmem_cap) - w_bytes - (2 << 20)
        row_bytes = (x_buffers * D_in * 4       # streamed f32 x tiles
                     + D_in * 2 + H_p * 2       # in-kernel bf16 copies of x, h
                     + H_p * 4                  # f32 hidden activation
                     + 2 * D_out_p * 4          # double-buffered output tiles
                     + 2 * D_out_p * 4)         # softmax temporaries (z, e)
        tb = min(tb_cap, max(8, (budget // row_bytes) // 8 * 8))
        tb = min(tb, _round_up(B, 8))           # never bigger than the batch
        if B > 8:
            # >=2 grid steps so both v7x TensorCores get work on the
            # "parallel" batch axis.
            tb = min(tb, _round_up(pl.cdiv(B, 2), 8))
        tb = max(tb, 8)

        Bp = _round_up(B, tb)
        grid = (Bp // tb,)

        # Batch-only zero pad, and only when the tile does not divide B.
        xp = x if Bp == B else jnp.pad(x, ((0, Bp - B), (0, 0)))

        # ---- Accurate VMEM request + headroom (never the full physical VMEM).
        footprint = w_bytes + tb * row_bytes
        vmem_limit = min(int(0.85 * vmem_cap),
                         max(16 * 1024 * 1024, footprint + (4 << 20)))

        cost = pl.CostEstimate(
            flops=2 * Bp * (D_in * H_p + H_p * D_out_p),
            transcendentals=Bp * D_out_p,
            bytes_accessed=int(Bp * D_in * 4 + w_bytes + Bp * D_out_p * 4),
        )

        out_p = pl.pallas_call(
            mlp_kernel,
            out_shape=jax.ShapeDtypeStruct((Bp, D_out_p), x.dtype),
            grid_spec=pltpu.PrefetchScalarGridSpec(
                num_scalar_prefetch=0,
                grid=grid,
                in_specs=[
                    # x: un-padded feature dim (== full array dim), f32,
                    # streamed per step with generation-dependent depth.
                    pl.BlockSpec((tb, D_in), lambda i: (i, 0),
                                 pipeline_mode=pl.Buffered(x_buffers)),
                    # Weights/biases: constant index_map -> fetched once;
                    # single-buffered to halve resident VMEM.
                    pl.BlockSpec((D_in, H_p), lambda i: (0, 0),
                                 pipeline_mode=pl.Buffered(1)),
                    pl.BlockSpec((1, H_p), lambda i: (0, 0),
                                 pipeline_mode=pl.Buffered(1)),
                    pl.BlockSpec((H_p, D_out_p), lambda i: (0, 0),
                                 pipeline_mode=pl.Buffered(1)),
                    pl.BlockSpec((1, D_out_p), lambda i: (0, 0),
                                 pipeline_mode=pl.Buffered(1)),
                ],
                # Lane-dense output (D_out_p multiple of 128) -> unmasked vst.
                out_specs=pl.BlockSpec((tb, D_out_p), lambda i: (i, 0)),
            ),
            compiler_params=pltpu.CompilerParams(
                dimension_semantics=("parallel",),
                vmem_limit_bytes=int(vmem_limit),
            ),
            cost_estimate=cost,
        )(xp, w1p, b1p, w2p, b2p)

        return out_p[:B, :D_out]

    return forward


def mlp_ref(x, w1, b1, w2, b2):
    h = jnp.maximum(x @ w1 + b1, 0.0)
    z = h @ w2 + b2
    return jax.nn.softmax(z, axis=1)


def init_params(key, in_dim, hidden_dim, out_dim):
    # PyTorch nn.Linear default init: U(-1/sqrt(fan_in), 1/sqrt(fan_in)).
    # Weights stored transposed relative to torch: (fan_in, fan_out).
    # The module's first layer consumes width 2*in_dim, so fan_in1 = 2*in_dim.
    k1, k2, k3, k4 = jax.random.split(key, 4)
    fan1, fan2 = 2 * in_dim, hidden_dim
    u = jax.random.uniform
    w1 = u(k1, (fan1, hidden_dim), jnp.float32, -1.0 / fan1 ** 0.5, 1.0 / fan1 ** 0.5)
    b1 = u(k2, (hidden_dim,), jnp.float32, -1.0 / fan1 ** 0.5, 1.0 / fan1 ** 0.5)
    w2 = u(k3, (fan2, out_dim), jnp.float32, -1.0 / fan2 ** 0.5, 1.0 / fan2 ** 0.5)
    b2 = u(k4, (out_dim,), jnp.float32, -1.0 / fan2 ** 0.5, 1.0 / fan2 ** 0.5)
    return w1, b1, w2, b2


if __name__ == "__main__":
    key = jax.random.PRNGKey(0)
    kx, kp = jax.random.split(key)

    in_dim, hidden_dim, out_dim = 16, 32, 16   # module input width is 2*in_dim
    batch = 256                                # -> two 128-row grid steps

    x = jax.random.normal(kx, (batch, 2 * in_dim), jnp.float32)
    w1, b1, w2, b2 = init_params(kp, in_dim, hidden_dim, out_dim)

    mlp = make_mlp(w1, b1, w2, b2)             # params padded/cast ONCE here
    out = jax.block_until_ready(mlp(x))
    ref = mlp_ref(x, w1, b1, w2, b2)

    assert out.shape == (batch, out_dim)
    # bf16 matmul operands -> loosened tolerance vs the f32 reference.
    assert jnp.allclose(out, ref, atol=2e-2, rtol=0.0), "mismatch vs reference"
    # Exact f32 softmax normalization -> rows sum to 1 tightly.
    assert jnp.allclose(out.sum(axis=1), 1.0, atol=1e-3), "rows must sum to 1"

    print("KERNEL_OK")
</pallas_src>

<mosaic_0001>
module attributes {stable_mosaic.version = 11 : i64} {
  func.func @mlp_kernel(%arg0: i32, %arg1: memref<128x32xf32, #tpu.memory_space<vmem>>, %arg2: memref<32x128xbf16, #tpu.memory_space<vmem>>, %arg3: memref<1x128xf32, #tpu.memory_space<vmem>>, %arg4: memref<128x128xbf16, #tpu.memory_space<vmem>>, %arg5: memref<1x128xf32, #tpu.memory_space<vmem>>, %arg6: memref<128x128xf32, #tpu.memory_space<vmem>>) attributes {dimension_semantics = [#tpu.dimension_semantics<parallel>], iteration_bounds = array<i64: 2>, scalar_prefetch = 0 : i64, scratch_operands = 0 : i64, tpu.core_type = #tpu.core_type<tc>, window_params = [{pipeline_mode = #tpu.pipeline_mode<double_buffered>, transform_indices = @transform_0, window_bounds = array<i64: 128, 32>}, {pipeline_mode = #tpu.pipeline_mode<synchronous>, transform_indices = @transform_1, window_bounds = array<i64: 32, 128>}, {pipeline_mode = #tpu.pipeline_mode<synchronous>, transform_indices = @transform_2, window_bounds = array<i64: 1, 128>}, {pipeline_mode = #tpu.pipeline_mode<synchronous>, transform_indices = @transform_3, window_bounds = array<i64: 128, 128>}, {pipeline_mode = #tpu.pipeline_mode<synchronous>, transform_indices = @transform_4, window_bounds = array<i64: 1, 128>}, {transform_indices = @transform_5, window_bounds = array<i64: 128, 128>}]} {
    %c0 = arith.constant 0 : index
    %c0_0 = arith.constant 0 : index
    %0 = vector.load %arg1[%c0, %c0_0] : memref<128x32xf32, #tpu.memory_space<vmem>>, vector<128x32xf32>
    %1 = arith.truncf %0 : vector<128x32xf32> to vector<128x32xbf16>
    %c0_1 = arith.constant 0 : index
    %c0_2 = arith.constant 0 : index
    %2 = vector.load %arg2[%c0_1, %c0_2] : memref<32x128xbf16, #tpu.memory_space<vmem>>, vector<32x128xbf16>
    %cst = arith.constant dense<0.000000e+00> : vector<128x128xf32>
    %3 = tpu.matmul %1, %2, %cst {dimension_numbers = #tpu.dot_dimension_numbers<[1], [0], [0], [1], [0, 0, 1, 1], [], []>} : vector<128x32xbf16>, vector<32x128xbf16>, vector<128x128xf32> -> vector<128x128xf32>
    %c0_3 = arith.constant 0 : index
    %c0_4 = arith.constant 0 : index
    %4 = vector.load %arg3[%c0_3, %c0_4] : memref<1x128xf32, #tpu.memory_space<vmem>>, vector<1x128xf32>
    %5 = vector.broadcast %4 : vector<1x128xf32> to vector<128x128xf32>
    %6 = arith.addf %3, %5 : vector<128x128xf32>
    %cst_5 = arith.constant 0.000000e+00 : f32
    %7 = vector.broadcast %cst_5 : f32 to vector<128x128xf32>
    %8 = arith.maximumf %6, %7 : vector<128x128xf32>
    %9 = arith.truncf %8 : vector<128x128xf32> to vector<128x128xbf16>
    %c0_6 = arith.constant 0 : index
    %c0_7 = arith.constant 0 : index
    %10 = vector.load %arg4[%c0_6, %c0_7] : memref<128x128xbf16, #tpu.memory_space<vmem>>, vector<128x128xbf16>
    %cst_8 = arith.constant dense<0.000000e+00> : vector<128x128xf32>
    %11 = tpu.matmul %9, %10, %cst_8 {dimension_numbers = #tpu.dot_dimension_numbers<[1], [0], [0], [1], [0, 0, 1, 1], [], []>} : vector<128x128xbf16>, vector<128x128xbf16>, vector<128x128xf32> -> vector<128x128xf32>
    %c0_9 = arith.constant 0 : index
    %c0_10 = arith.constant 0 : index
    %12 = vector.load %arg5[%c0_9, %c0_10] : memref<1x128xf32, #tpu.memory_space<vmem>>, vector<1x128xf32>
    %13 = vector.broadcast %12 : vector<1x128xf32> to vector<128x128xf32>
    %14 = arith.addf %11, %13 : vector<128x128xf32>
    %cst_11 = arith.constant dense<0xFF800000> : vector<128xf32>
    %15 = vector.multi_reduction <maximumf>, %14, %cst_11 [1] : vector<128x128xf32> to vector<128xf32>
    %16 = vector.shape_cast %15 : vector<128xf32> to vector<128x1xf32>
    %17 = vector.broadcast %16 : vector<128x1xf32> to vector<128x128xf32>
    %18 = arith.subf %14, %17 : vector<128x128xf32>
    %19 = math.exp %18 : vector<128x128xf32>
    %cst_12 = arith.constant dense<0.000000e+00> : vector<128xf32>
    %20 = vector.multi_reduction <add>, %19, %cst_12 [1] : vector<128x128xf32> to vector<128xf32>
    %21 = vector.shape_cast %20 : vector<128xf32> to vector<128x1xf32>
    %22 = vector.broadcast %21 : vector<128x1xf32> to vector<128x128xf32>
    %23 = arith.divf %19, %22 : vector<128x128xf32>
    %c0_13 = arith.constant 0 : index
    %c0_14 = arith.constant 0 : index
    %24 = vector.load %arg6[%c0_13, %c0_14] : memref<128x128xf32, #tpu.memory_space<vmem>>, vector<128x128xf32>
    tpu.vector_store %arg6[%c0_13, %c0_14], %23 {strides = array<i32>} : memref<128x128xf32, #tpu.memory_space<vmem>>, vector<128x128xf32>,
    return
  }
  func.func @transform_0(%arg0: i32) -> (i32, i32) {
    %c0_i32 = arith.constant 0 : i32
    %c0_i32_0 = arith.constant 0 : i32
    return %arg0, %c0_i32 : i32, i32
  }
  func.func @transform_1(%arg0: i32) -> (i32, i32) {
    %c0_i32 = arith.constant 0 : i32
    %c0_i32_0 = arith.constant 0 : i32
    %c0_i32_1 = arith.constant 0 : i32
    return %c0_i32, %c0_i32_0 : i32, i32
  }
  func.func @transform_2(%arg0: i32) -> (i32, i32) {
    %c0_i32 = arith.constant 0 : i32
    %c0_i32_0 = arith.constant 0 : i32
    %c0_i32_1 = arith.constant 0 : i32
    return %c0_i32, %c0_i32_0 : i32, i32
  }
  func.func @transform_3(%arg0: i32) -> (i32, i32) {
    %c0_i32 = arith.constant 0 : i32
    %c0_i32_0 = arith.constant 0 : i32
    %c0_i32_1 = arith.constant 0 : i32
    return %c0_i32, %c0_i32_0 : i32, i32
  }
  func.func @transform_4(%arg0: i32) -> (i32, i32) {
    %c0_i32 = arith.constant 0 : i32
    %c0_i32_0 = arith.constant 0 : i32
    %c0_i32_1 = arith.constant 0 : i32
    return %c0_i32, %c0_i32_0 : i32, i32
  }
  func.func @transform_5(%arg0: i32) -> (i32, i32) {
    %c0_i32 = arith.constant 0 : i32
    %c0_i32_0 = arith.constant 0 : i32
    return %arg0, %c0_i32 : i32, i32
  }
}

</mosaic_0001>

<llo_original>
// kernel: forward.1
$region0: #{forward.1}
  #allocation0 [shape = 'u32[]', space=smem, size = 0x4, offset = 0x4, fixed_abs, tag = 'smem constant byte address 0x4 - core index']
  #allocation1 [shape = 'u32[144,128]{1,0:T(1,128)}', space=vmem, size = 0x12000, scoped, tag = 'internal scratch']
  %s0 = inlined_call_operand.vmem [shape: f32[256,32], index: 0, kind: input, shape index: {}]
  %s1 = inlined_call_operand.vmem [shape: bf16[32,128], index: 1, kind: input, shape index: {}]
  %s2 = inlined_call_operand.vmem [shape: f32[1,128], index: 2, kind: input, shape index: {}]
  %s3 = inlined_call_operand.vmem [shape: bf16[128,128], index: 3, kind: input, shape index: {}]
  %s4 = inlined_call_operand.vmem [shape: f32[1,128], index: 4, kind: input, shape index: {}]
  %s5 = inlined_call_operand.vmem [shape: f32[256,128], index: 5, kind: output, shape index: {}]
  %s6 = sld [smem:[#allocation0]]
  $region53: #{forward.1} parent=0
    _
  %s8 = ssub.s32 1, %s6
  %s9 = scalar_select 0, %s8, %s6
  loop: start=0, step=1, limit=4
  $region2: #{forward.1} parent=0 // loop_pre_header
    _
  $region3: #{forward.1} parent=0 // loop_header
    %s11 = sphi 0, %s15
    %p12 = scmp.ge.s32.totalorder %s11, 4
    %s21 = sphi 0, %s23
    %s24 = sphi 0, %s21
    %s25 = sphi 0, %s24
    %s41 = sphi 0, %s25
    %s45 = sphi 0, %s45
    %s47 = sphi 0, %s45
    %s48 = sphi 0, %s47
    %s62 = sphi 0, %s48
    %s66 = sphi 0, %s66
    %s68 = sphi 0, %s66
    %s69 = sphi 0, %s68
    %s83 = sphi 0, %s69
    %s87 = sphi 0, %s87
    %s89 = sphi 0, %s87
    %s90 = sphi 0, %s89
    %s104 = sphi 0, %s90
    %s108 = sphi 0, %s108
    %s110 = sphi 0, %s108
    %s111 = sphi 0, %s110
    %s125 = sphi 0, %s111
    %s131 = sphi 0, %s133
    %s134 = sphi 0, %s131
    %s135 = sphi 0, %s134
    %s151 = sphi 0, %s135
  $region4: #{forward.1} parent=0 // loop_header_branch
    %14 = sbr.rel (%p12) target = $region8
  $region5: #{forward.1} parent=0 // loop_body
    %s16 = ssub.s32 %s11, 1
    %s17 = ssub.s32 %s11, 2
    %s18 = sadd.s32 %s11, 1
    %s19 = ssub.s32 %s11, %s18
    %p20 = scmp.eq.s32.totalorder %s19, 0
    %s22 = sadd.s32 %s21, 1
    %s23 = scalar_select %p20, %s21, %s22
    %p26 = pneg %p20
    %p27 = scmp.eq.s32.totalorder %s11, 1
    %p28 = por %p26, %p27
    %p29 = scmp.ne.s32.totalorder %s21, %s24
    %p30 = scmp.eq.s32.totalorder %s11, 0
    %p31 = por %p29, %p30
    %p32 = scmp.ne.s32.totalorder %s21, %s24
    %p33 = scmp.eq.s32.totalorder %s16, 1
    %p34 = por %p32, %p33
    %p35 = scmp.ne.s32.totalorder %s24, %s25
    %p36 = scmp.eq.s32.totalorder %s16, 0
    %p37 = por %p35, %p36
    %p38 = scmp.ne.s32.totalorder %s24, %s25
    %p39 = scmp.eq.s32.totalorder %s17, 1
    %p40 = por %p38, %p39
    %p42 = scmp.ne.s32.totalorder %s25, %s41
    %p43 = scmp.eq.s32.totalorder %s17, 0
    %p44 = por %p42, %p43
    %s46 = sadd.s32 %s45, 1
    %p49 = scmp.eq.s32.totalorder %s11, 1
    %p50 = scmp.ne.s32.totalorder %s45, %s47
    %p51 = scmp.eq.s32.totalorder %s11, 0
    %p52 = por %p50, %p51
    %p53 = scmp.ne.s32.totalorder %s45, %s47
    %p54 = scmp.eq.s32.totalorder %s16, 1
    %p55 = por %p53, %p54
    %p56 = scmp.ne.s32.totalorder %s47, %s48
    %p57 = scmp.eq.s32.totalorder %s16, 0
    %p58 = por %p56, %p57
    %p59 = scmp.ne.s32.totalorder %s47, %s48
    %p60 = scmp.eq.s32.totalorder %s17, 1
    %p61 = por %p59, %p60
    %p63 = scmp.ne.s32.totalorder %s48, %s62
    %p64 = scmp.eq.s32.totalorder %s17, 0
    %p65 = por %p63, %p64
    %s67 = sadd.s32 %s66, 1
    %p70 = scmp.eq.s32.totalorder %s11, 1
    %p71 = scmp.ne.s32.totalorder %s66, %s68
    %p72 = scmp.eq.s32.totalorder %s11, 0
    %p73 = por %p71, %p72
    %p74 = scmp.ne.s32.totalorder %s66, %s68
    %p75 = scmp.eq.s32.totalorder %s16, 1
    %p76 = por %p74, %p75
    %p77 = scmp.ne.s32.totalorder %s68, %s69
    %p78 = scmp.eq.s32.totalorder %s16, 0
    %p79 = por %p77, %p78
    %p80 = scmp.ne.s32.totalorder %s68, %s69
    %p81 = scmp.eq.s32.totalorder %s17, 1
    %p82 = por %p80, %p81
    %p84 = scmp.ne.s32.totalorder %s69, %s83
    %p85 = scmp.eq.s32.totalorder %s17, 0
    %p86 = por %p84, %p85
    %s88 = sadd.s32 %s87, 1
    %p91 = scmp.eq.s32.totalorder %s11, 1
    %p92 = scmp.ne.s32.totalorder %s87, %s89
    %p93 = scmp.eq.s32.totalorder %s11, 0
    %p94 = por %p92, %p93
    %p95 = scmp.ne.s32.totalorder %s87, %s89
    %p96 = scmp.eq.s32.totalorder %s16, 1
    %p97 = por %p95, %p96
    %p98 = scmp.ne.s32.totalorder %s89, %s90
    %p99 = scmp.eq.s32.totalorder %s16, 0
    %p100 = por %p98, %p99
    %p101 = scmp.ne.s32.totalorder %s89, %s90
    %p102 = scmp.eq.s32.totalorder %s17, 1
    %p103 = por %p101, %p102
    %p105 = scmp.ne.s32.totalorder %s90, %s104
    %p106 = scmp.eq.s32.totalorder %s17, 0
    %p107 = por %p105, %p106
    %s109 = sadd.s32 %s108, 1
    %p112 = scmp.eq.s32.totalorder %s11, 1
    %p113 = scmp.ne.s32.totalorder %s108, %s110
    %p114 = scmp.eq.s32.totalorder %s11, 0
    %p115 = por %p113, %p114
    %p116 = scmp.ne.s32.totalorder %s108, %s110
    %p117 = scmp.eq.s32.totalorder %s16, 1
    %p118 = por %p116, %p117
    %p119 = scmp.ne.s32.totalorder %s110, %s111
    %p120 = scmp.eq.s32.totalorder %s16, 0
    %p121 = por %p119, %p120
    %p122 = scmp.ne.s32.totalorder %s110, %s111
    %p123 = scmp.eq.s32.totalorder %s17, 1
    %p124 = por %p122, %p123
    %p126 = scmp.ne.s32.totalorder %s111, %s125
    %p127 = scmp.eq.s32.totalorder %s17, 0
    %p128 = por %p126, %p127
    %s129 = ssub.s32 %s11, %s18
    %p130 = scmp.eq.s32.totalorder %s129, 0
    %s132 = sadd.s32 %s131, 1
    %s133 = scalar_select %p130, %s131, %s132
    %p136 = pneg %p130
    %p137 = scmp.eq.s32.totalorder %s11, 1
    %p138 = por %p136, %p137
    %p139 = scmp.ne.s32.totalorder %s131, %s134
    %p140 = scmp.eq.s32.totalorder %s11, 0
    %p141 = por %p139, %p140
    %p142 = scmp.ne.s32.totalorder %s131, %s134
    %p143 = scmp.eq.s32.totalorder %s16, 1
    %p144 = por %p142, %p143
    %p145 = scmp.ne.s32.totalorder %s134, %s135
    %p146 = scmp.eq.s32.totalorder %s16, 0
    %p147 = por %p145, %p146
    %p148 = scmp.ne.s32.totalorder %s134, %s135
    %p149 = scmp.eq.s32.totalorder %s17, 1
    %p150 = por %p148, %p149
    %p152 = scmp.ne.s32.totalorder %s135, %s151
    %p153 = scmp.eq.s32.totalorder %s17, 0
    %p154 = por %p152, %p153
    %p155 = scmp.le.s32.totalorder 1, %s11
    %p156 = scmp.lt.s32.totalorder %s11, 3
    %p157 = pnand %p155, %p156
    %p158 = pneg %p157
    // Predicated region
    $region9: #{forward.1} parent=5 // pred_check
      _
    $region10: #{forward.1} parent=5 // pred_check_branch
      %160 = sbr.rel (%p157) target = $region12
    $region11: #{forward.1} parent=5 // pred_region
      %s161 = ssub.s32 %s11, 1
      // Predicated region
      $region13: #{forward.1} parent=11 // pred_check
        %p162 = pneg %p58
      $region14: #{forward.1} parent=11 // pred_check_branch
        %164 = sbr.rel (%p162) target = $region16
      $region15: #{forward.1} parent=11 // pred_region
        _
      $region16: #{forward.1} parent=11 // pred_fallthru
        _
      // Predicated region
      $region17: #{forward.1} parent=11 // pred_check
        %p165 = pneg %p79
      $region18: #{forward.1} parent=11 // pred_check_branch
        %167 = sbr.rel (%p165) target = $region20
      $region19: #{forward.1} parent=11 // pred_region
        _
      $region20: #{forward.1} parent=11 // pred_fallthru
        _
      // Predicated region
      $region21: #{forward.1} parent=11 // pred_check
        %p168 = pneg %p100
      $region22: #{forward.1} parent=11 // pred_check_branch
        %170 = sbr.rel (%p168) target = $region24
      $region23: #{forward.1} parent=11 // pred_region
        _
      $region24: #{forward.1} parent=11 // pred_fallthru
        _
      // Predicated region
      $region25: #{forward.1} parent=11 // pred_check
        %p171 = pneg %p121
      $region26: #{forward.1} parent=11 // pred_check_branch
        %173 = sbr.rel (%p171) target = $region28
      $region27: #{forward.1} parent=11 // pred_region
        _
      $region28: #{forward.1} parent=11 // pred_fallthru
        _
    $region12: #{forward.1} parent=5 // pred_fallthru
      _
    %p174 = scmp.lt.s32.totalorder %s11, 2
    // Predicated region
    $region29: #{forward.1} parent=5 // pred_check
      %p175 = pneg %p174
    $region30: #{forward.1} parent=5 // pred_check_branch
      %177 = sbr.rel (%p175) target = $region32
    $region31: #{forward.1} parent=5 // pred_region
      // Predicated region
      $region33: #{forward.1} parent=31 // pred_check
        %p178 = pneg %p31
      $region34: #{forward.1} parent=31 // pred_check_branch
        %180 = sbr.rel (%p178) target = $region36
      $region35: #{forward.1} parent=31 // pred_region
        %s181 = smul.u32 16, %s11
        %p182 = scmp.lt.s32.totalorder %s181, 31
        %s183 = scalar_select %p182, %s181, 31
        %s184 = smul.addr %s183, 8
        %s185 = scalar_lea.vmem %s0, %s184
        %s186 = smul.u32 16, %s11
      $region36: #{forward.1} parent=31 // pred_fallthru
        _
    $region32: #{forward.1} parent=5 // pred_fallthru
      _
    %p187 = scmp.le.s32.totalorder 1, %s11
    %p188 = scmp.lt.s32.totalorder %s11, 3
    %p189 = pnand %p187, %p188
    %p190 = pneg %p189
    // Predicated region
    $region37: #{forward.1} parent=5 // pred_check
      _
    $region38: #{forward.1} parent=5 // pred_check_branch
      %192 = sbr.rel (%p189) target = $region40
    $region39: #{forward.1} parent=5 // pred_region
      %s193 = ssub.s32 %s11, 1
      %s194 = smul.u32 16, %s16
      %p195 = scmp.lt.s32.totalorder %s194, 31
      %s196 = scalar_select %p195, %s194, 31
      %s197 = smul.addr %s196, 8
      %s198 = scalar_lea.vmem %s0, %s197
      %p199 = pneg %p37
      %p200 = pneg %p34
      %p201 = pneg %p58
      %p202 = pneg %p55
      %p203 = pneg %p79
      %p204 = pneg %p76
      %p205 = pneg %p100
      %p206 = pneg %p97
      %p207 = pneg %p121
      %p208 = pneg %p118
      %p209 = pneg %p147
      %p210 = pneg %p144
      %s211 = smul.u32 16, %s16
      %p212 = scmp.lt.s32.totalorder %s211, 31
      %s213 = scalar_select %p212, %s211, 31
      %s214 = smul.addr %s213, 8
      %s215 = scalar_lea.vmem %s5, %s214
      %s216 = smul.u32 16, %s16
      %p217 = scmp.lt.s32.totalorder %s216, 31
      %s218 = scalar_select %p217, %s216, 31
      %s219 = smul.addr %s218, 8
      %s220 = scalar_lea.vmem %s0, %s219
      %s221 = smul.u32 16, %s16
      %s222 = smul.u32 16, %s16
      %p223 = scmp.lt.s32.totalorder %s222, 31
      %s224 = scalar_select %p223, %s222, 31
      %s225 = smul.addr %s224, 8
      %s226 = scalar_lea.vmem %s5, %s225
      %s227 = smul.u32 16, %s16
      %v229 = vld [vmem:[%s220] sm:$0xff]
      %v230 = vld [vmem:[%s220 + $0x8] sm:$0xff]
      %v231 = vld [vmem:[%s220 + $0x10] sm:$0xff]
      %v232 = vld [vmem:[%s220 + $0x18] sm:$0xff]
      %v233 = vld [vmem:[%s220 + $0x20] sm:$0xff]
      %v234 = vld [vmem:[%s220 + $0x28] sm:$0xff]
      %v235 = vld [vmem:[%s220 + $0x30] sm:$0xff]
      %v236 = vld [vmem:[%s220 + $0x38] sm:$0xff]
      %v237 = vld [vmem:[%s220 + $0x40] sm:$0xff]
      %v238 = vld [vmem:[%s220 + $0x48] sm:$0xff]
      %v239 = vld [vmem:[%s220 + $0x50] sm:$0xff]
      %v240 = vld [vmem:[%s220 + $0x58] sm:$0xff]
      %v241 = vld [vmem:[%s220 + $0x60] sm:$0xff]
      %v242 = vld [vmem:[%s220 + $0x68] sm:$0xff]
      %v243 = vld [vmem:[%s220 + $0x70] sm:$0xff]
      %v244 = vld [vmem:[%s220 + $0x78] sm:$0xff]
      %v245 = vpack.c.bf16 %v230, %v229
      %v246 = vpack.c.bf16 %v232, %v231
      %v247 = vpack.c.bf16 %v234, %v233
      %v248 = vpack.c.bf16 %v236, %v235
      %v249 = vpack.c.bf16 %v238, %v237
      %v250 = vpack.c.bf16 %v240, %v239
      %v251 = vpack.c.bf16 %v242, %v241
      %v252 = vpack.c.bf16 %v244, %v243
      %v253 = vld [vmem:[%s1] sm:$0xf]
      %v254 = vld [vmem:[%s1 + $0x4] sm:$0xf]
      %v255 = vld [vmem:[%s1 + $0x8] sm:$0xf]
      %v256 = vld [vmem:[%s1 + $0xc] sm:$0xf]
      %v257 = vld [vmem:[%s2] sm:$0x1]
      %v259 = vlaneseq
      %v260 = vshrl.u32 %v259, 7
      %v261 = vsub.s32 0, %v260
      %v262 = vrot.slane %v257, %v261
      %v268 = vunpack.c.l.b16 %v253
      %v269 = vunpack.c.l.b16 %v254
      %v270 = vunpack.c.l.b16 %v255
      %v271 = vunpack.c.l.b16 %v256
      %v272 = vpack.c.b16 %v269, %v268
      %v273 = vpack.c.b16 %v271, %v270
      %vm276 = vcmask 261120
      %v278 = vsel %vm276, %v245, 0
      %v281 = vsel %vm276, %v246, 0
      %v284 = vsel %vm276, %v247, 0
      %v287 = vsel %vm276, %v248, 0
      %v290 = vsel %vm276, %v249, 0
      %v293 = vsel %vm276, %v250, 0
      %v296 = vsel %vm276, %v251, 0
      %v299 = vsel %vm276, %v252, 0
      %301 = vmatprep.subr.bf16.mxu0 0
      %302 = vmatpush1.bf16.msra.mxu0 %v272
      %303 = vmatprep.subr.bf16.mxu0 0
      %304 = vmatpush1.bf16.msra.mxu0 %v273
      %305 = vmatprep.subr.bf16.mxu0 0
      %306 = vmatpush1.bf16.msra.mxu0 0
      %307 = vmatprep.subr.bf16.mxu0 0
      %308 = vmatpush1.bf16.msra.mxu0 0
      %309 = vmatprep.subr.bf16.mxu0 0
      %310 = vmatpush1.bf16.msra.mxu0 0
      %311 = vmatprep.subr.bf16.mxu0 0
      %312 = vmatpush1.bf16.msra.mxu0 0
      %313 = vmatprep.subr.bf16.mxu0 0
      %314 = vmatpush1.bf16.msra.mxu0 0
      %315 = vmatprep.subr.bf16.mxu0 0
      %316 = vmatpush1.bf16.msra.mxu0 0
      %317 = vmatprep.subr.bf16.mxu0 0
      %318 = vmatpush1.bf16.msra.mxu0 0
      %319 = vmatprep.subr.bf16.mxu0 0
      %320 = vmatpush1.bf16.msra.mxu0 0
      %321 = vmatprep.subr.bf16.mxu0 0
      %322 = vmatpush1.bf16.msra.mxu0 0
      %323 = vmatprep.subr.bf16.mxu0 0
      %324 = vmatpush1.bf16.msra.mxu0 0
      %325 = vmatprep.subr.bf16.mxu0 0
      %326 = vmatpush1.bf16.msra.mxu0 0
      %327 = vmatprep.subr.bf16.mxu0 0
      %328 = vmatpush1.bf16.msra.mxu0 0
      %329 = vmatprep.subr.bf16.mxu0 0
      %330 = vmatpush1.bf16.msra.mxu0 0
      %331 = vmatprep.subr.bf16.mxu0 0
      %332 = vmatpush1.bf16.msra.mxu0 0
      %333 = vmatprep.mubr.bf16.mxu0 0
      %334 = vmatmul.mubr.bf16.gmra.mrb[0].mxu0 %v278
      %v335 = vpop.f32.mrb[0].mxu0
      %v336 = vadd.f32 %v262, %v335
      %v337 = vpop.f32.mrb[0].mxu0
      %v338 = vpop.f32.mrb[0].mxu0
      %v339 = vadd.f32 %v262, %v338
      %v340 = vpop.f32.mrb[0].mxu0
      %341 = vmatprep.mubr.bf16.mxu0 0
      %342 = vmatmul.mubr.bf16.gmra.mrb[0].mxu0 %v281
      %v343 = vpop.f32.mrb[0].mxu0
      %v344 = vadd.f32 %v262, %v343
      %v345 = vpop.f32.mrb[0].mxu0
      %v346 = vpop.f32.mrb[0].mxu0
      %v347 = vadd.f32 %v262, %v346
      %v348 = vpop.f32.mrb[0].mxu0
      %349 = vmatprep.mubr.bf16.mxu0 0
      %350 = vmatmul.mubr.bf16.gmra.mrb[0].mxu0 %v284
      %v351 = vpop.f32.mrb[0].mxu0
      %v352 = vadd.f32 %v262, %v351
      %v353 = vpop.f32.mrb[0].mxu0
      %v354 = vpop.f32.mrb[0].mxu0
      %v355 = vadd.f32 %v262, %v354
      %v356 = vpop.f32.mrb[0].mxu0
      %357 = vmatprep.mubr.bf16.mxu0 0
      %358 = vmatmul.mubr.bf16.gmra.mrb[0].mxu0 %v287
      %v359 = vpop.f32.mrb[0].mxu0
      %v360 = vadd.f32 %v262, %v359
      %v361 = vpop.f32.mrb[0].mxu0
      %v362 = vpop.f32.mrb[0].mxu0
      %v363 = vadd.f32 %v262, %v362
      %v364 = vpop.f32.mrb[0].mxu0
      %365 = vmatprep.mubr.bf16.mxu0 0
      %366 = vmatmul.mubr.bf16.gmra.mrb[0].mxu0 %v290
      %v367 = vpop.f32.mrb[0].mxu0
      %v368 = vadd.f32 %v262, %v367
      %v369 = vpop.f32.mrb[0].mxu0
      %v370 = vpop.f32.mrb[0].mxu0
      %v371 = vadd.f32 %v262, %v370
      %v372 = vpop.f32.mrb[0].mxu0
      %373 = vmatprep.mubr.bf16.mxu0 0
      %374 = vmatmul.mubr.bf16.gmra.mrb[0].mxu0 %v293
      %v375 = vpop.f32.mrb[0].mxu0
      %v376 = vadd.f32 %v262, %v375
      %v377 = vpop.f32.mrb[0].mxu0
      %v378 = vpop.f32.mrb[0].mxu0
      %v379 = vadd.f32 %v262, %v378
      %v380 = vpop.f32.mrb[0].mxu0
      %381 = vmatprep.mubr.bf16.mxu0 0
      %382 = vmatmul.mubr.bf16.gmra.mrb[0].mxu0 %v296
      %v383 = vpop.f32.mrb[0].mxu0
      %v384 = vadd.f32 %v262, %v383
      %v385 = vpop.f32.mrb[0].mxu0
      %v386 = vpop.f32.mrb[0].mxu0
      %v387 = vadd.f32 %v262, %v386
      %v388 = vpop.f32.mrb[0].mxu0
      %389 = vmatprep.mubr.bf16.mxu0 0
      %390 = vmatmul.mubr.bf16.gmra.mrb[0].mxu0 %v299
      %v391 = vpop.f32.mrb[0].mxu0
      %v392 = vadd.f32 %v262, %v391
      %v393 = vpop.f32.mrb[0].mxu0
      %v394 = vpop.f32.mrb[0].mxu0
      %v395 = vadd.f32 %v262, %v394
      %v396 = vpop.f32.mrb[0].mxu0
      %397 = vdwg.mxu0
      %v398 = vmax.f32 %v336, 0.0
      %v399 = vmax.f32 %v339, 0.0
      %v400 = vmax.f32 %v344, 0.0
      %v401 = vmax.f32 %v347, 0.0
      %v402 = vmax.f32 %v352, 0.0
      %v403 = vmax.f32 %v355, 0.0
      %v404 = vmax.f32 %v360, 0.0
      %v405 = vmax.f32 %v363, 0.0
      %v406 = vmax.f32 %v368, 0.0
      %v407 = vmax.f32 %v371, 0.0
      %v408 = vmax.f32 %v376, 0.0
      %v409 = vmax.f32 %v379, 0.0
      %v410 = vmax.f32 %v384, 0.0
      %v411 = vmax.f32 %v387, 0.0
      %v412 = vmax.f32 %v392, 0.0
      %v413 = vmax.f32 %v395, 0.0
      %v414 = vpack.c.bf16 %v399, %v398
      %v415 = vpack.c.bf16 %v401, %v400
      %v416 = vpack.c.bf16 %v403, %v402
      %v417 = vpack.c.bf16 %v405, %v404
      %v418 = vpack.c.bf16 %v407, %v406
      %v419 = vpack.c.bf16 %v409, %v408
      %v420 = vpack.c.bf16 %v411, %v410
      %v421 = vpack.c.bf16 %v413, %v412
      %v422 = vld [vmem:[%s3] sm:$0xf]
      %v423 = vld [vmem:[%s3 + $0x4] sm:$0xf]
      %v424 = vld [vmem:[%s3 + $0x8] sm:$0xf]
      %v425 = vld [vmem:[%s3 + $0xc] sm:$0xf]
      %v426 = vld [vmem:[%s3 + $0x10] sm:$0xf]
      %v427 = vld [vmem:[%s3 + $0x14] sm:$0xf]
      %v428 = vld [vmem:[%s3 + $0x18] sm:$0xf]
      %v429 = vld [vmem:[%s3 + $0x1c] sm:$0xf]
      %v430 = vld [vmem:[%s3 + $0x20] sm:$0xf]
      %v431 = vld [vmem:[%s3 + $0x24] sm:$0xf]
      %v432 = vld [vmem:[%s3 + $0x28] sm:$0xf]
      %v433 = vld [vmem:[%s3 + $0x2c] sm:$0xf]
      %v434 = vld [vmem:[%s3 + $0x30] sm:$0xf]
      %v435 = vld [vmem:[%s3 + $0x34] sm:$0xf]
      %v436 = vld [vmem:[%s3 + $0x38] sm:$0xf]
      %v437 = vld [vmem:[%s3 + $0x3c] sm:$0xf]
      %v438 = vld [vmem:[%s4] sm:$0x1]
      %v440 = vlaneseq
      %v441 = vshrl.u32 %v440, 7
      %v442 = vsub.s32 0, %v441
      %v443 = vrot.slane %v438, %v442
      %v461 = vunpack.c.l.b16 %v422
      %v462 = vunpack.c.l.b16 %v423
      %v463 = vunpack.c.l.b16 %v424
      %v464 = vunpack.c.l.b16 %v425
      %v465 = vunpack.c.l.b16 %v426
      %v466 = vunpack.c.l.b16 %v427
      %v467 = vunpack.c.l.b16 %v428
      %v468 = vunpack.c.l.b16 %v429
      %v469 = vunpack.c.l.b16 %v430
      %v470 = vunpack.c.l.b16 %v431
      %v471 = vunpack.c.l.b16 %v432
      %v472 = vunpack.c.l.b16 %v433
      %v473 = vunpack.c.l.b16 %v434
      %v474 = vunpack.c.l.b16 %v435
      %v475 = vunpack.c.l.b16 %v436
      %v476 = vunpack.c.l.b16 %v437
      %v477 = vpack.c.b16 %v462, %v461
      %v478 = vpack.c.b16 %v464, %v463
      %v479 = vpack.c.b16 %v466, %v465
      %v480 = vpack.c.b16 %v468, %v467
      %v481 = vpack.c.b16 %v470, %v469
      %v482 = vpack.c.b16 %v472, %v471
      %v483 = vpack.c.b16 %v474, %v473
      %v484 = vpack.c.b16 %v476, %v475
      %493 = vmatprep.subr.bf16.mxu0 0
      %494 = vmatpush1.bf16.msra.mxu0 %v477
      %495 = vmatprep.subr.bf16.mxu0 0
      %496 = vmatpush1.bf16.msra.mxu0 %v478
      %497 = vmatprep.subr.bf16.mxu0 0
      %498 = vmatpush1.bf16.msra.mxu0 %v479
      %499 = vmatprep.subr.bf16.mxu0 0
      %500 = vmatpush1.bf16.msra.mxu0 %v480
      %501 = vmatprep.subr.bf16.mxu0 0
      %502 = vmatpush1.bf16.msra.mxu0 %v481
      %503 = vmatprep.subr.bf16.mxu0 0
      %504 = vmatpush1.bf16.msra.mxu0 %v482
      %505 = vmatprep.subr.bf16.mxu0 0
      %506 = vmatpush1.bf16.msra.mxu0 %v483
      %507 = vmatprep.subr.bf16.mxu0 0
      %508 = vmatpush1.bf16.msra.mxu0 %v484
      %509 = vmatprep.subr.bf16.mxu0 0
      %510 = vmatpush1.bf16.msra.mxu0 0
      %511 = vmatprep.subr.bf16.mxu0 0
      %512 = vmatpush1.bf16.msra.mxu0 0
      %513 = vmatprep.subr.bf16.mxu0 0
      %514 = vmatpush1.bf16.msra.mxu0 0
      %515 = vmatprep.subr.bf16.mxu0 0
      %516 = vmatpush1.bf16.msra.mxu0 0
      %517 = vmatprep.subr.bf16.mxu0 0
      %518 = vmatpush1.bf16.msra.mxu0 0
      %519 = vmatprep.subr.bf16.mxu0 0
      %520 = vmatpush1.bf16.msra.mxu0 0
      %521 = vmatprep.subr.bf16.mxu0 0
      %522 = vmatpush1.bf16.msra.mxu0 0
      %523 = vmatprep.subr.bf16.mxu0 0
      %524 = vmatpush1.bf16.msra.mxu0 0
      %525 = vmatprep.mubr.bf16.mxu0 0
      %526 = vmatmul.mubr.bf16.gmra.mrb[0].mxu0 %v414
      %v527 = vpop.f32.mrb[0].mxu0
      %v528 = vadd.f32 %v443, %v527
      %v529 = vpop.f32.mrb[0].mxu0
      %v530 = vpop.f32.mrb[0].mxu0
      %v531 = vadd.f32 %v443, %v530
      %v532 = vpop.f32.mrb[0].mxu0
      %533 = vmatprep.mubr.bf16.mxu0 0
      %534 = vmatmul.mubr.bf16.gmra.mrb[0].mxu0 %v415
      %v535 = vpop.f32.mrb[0].mxu0
      %v536 = vadd.f32 %v443, %v535
      %v537 = vpop.f32.mrb[0].mxu0
      %v538 = vpop.f32.mrb[0].mxu0
      %v539 = vadd.f32 %v443, %v538
      %v540 = vpop.f32.mrb[0].mxu0
      %541 = vmatprep.mubr.bf16.mxu0 0
      %542 = vmatmul.mubr.bf16.gmra.mrb[0].mxu0 %v416
      %v543 = vpop.f32.mrb[0].mxu0
      %v544 = vadd.f32 %v443, %v543
      %v545 = vpop.f32.mrb[0].mxu0
      %v546 = vpop.f32.mrb[0].mxu0
      %v547 = vadd.f32 %v443, %v546
      %v548 = vpop.f32.mrb[0].mxu0
      %549 = vmatprep.mubr.bf16.mxu0 0
      %550 = vmatmul.mubr.bf16.gmra.mrb[0].mxu0 %v417
      %v551 = vpop.f32.mrb[0].mxu0
      %v552 = vadd.f32 %v443, %v551
      %v553 = vpop.f32.mrb[0].mxu0
      %v554 = vpop.f32.mrb[0].mxu0
      %v555 = vadd.f32 %v443, %v554
      %v556 = vpop.f32.mrb[0].mxu0
      %557 = vmatprep.mubr.bf16.mxu0 0
      %558 = vmatmul.mubr.bf16.gmra.mrb[0].mxu0 %v418
      %v559 = vpop.f32.mrb[0].mxu0
      %v560 = vadd.f32 %v443, %v559
      %v561 = vpop.f32.mrb[0].mxu0
      %v562 = vpop.f32.mrb[0].mxu0
      %v563 = vadd.f32 %v443, %v562
      %v564 = vpop.f32.mrb[0].mxu0
      %565 = vmatprep.mubr.bf16.mxu0 0
      %566 = vmatmul.mubr.bf16.gmra.mrb[0].mxu0 %v419
      %v567 = vpop.f32.mrb[0].mxu0
      %v568 = vadd.f32 %v443, %v567
      %v569 = vpop.f32.mrb[0].mxu0
      %v570 = vpop.f32.mrb[0].mxu0
      %v571 = vadd.f32 %v443, %v570
      %v572 = vpop.f32.mrb[0].mxu0
      %573 = vmatprep.mubr.bf16.mxu0 0
      %574 = vmatmul.mubr.bf16.gmra.mrb[0].mxu0 %v420
      %v575 = vpop.f32.mrb[0].mxu0
      %v576 = vadd.f32 %v443, %v575
      %v577 = vpop.f32.mrb[0].mxu0
      %v578 = vpop.f32.mrb[0].mxu0
      %v579 = vadd.f32 %v443, %v578
      %v580 = vpop.f32.mrb[0].mxu0
      %581 = vmatprep.mubr.bf16.mxu0 0
      %582 = vmatmul.mubr.bf16.gmra.mrb[0].mxu0 %v421
      %v583 = vpop.f32.mrb[0].mxu0
      %v584 = vadd.f32 %v443, %v583
      %v585 = vpop.f32.mrb[0].mxu0
      %v586 = vpop.f32.mrb[0].mxu0
      %v587 = vadd.f32 %v443, %v586
      %v588 = vpop.f32.mrb[0].mxu0
      %589 = vdwg.mxu0
      %590 = vmax.xlane.f32.xlu0 %v528
      %v591 = vpop.xlane.xlu0 %590
      %592 = vmax.xlane.f32.xlu0 %v531
      %v593 = vpop.xlane.xlu0 %592
      %594 = vmax.xlane.f32.xlu0 %v536
      %v595 = vpop.xlane.xlu0 %594
      %596 = vmax.xlane.f32.xlu0 %v539
      %v597 = vpop.xlane.xlu0 %596
      %598 = vmax.xlane.f32.xlu0 %v544
      %v599 = vpop.xlane.xlu0 %598
      %600 = vmax.xlane.f32.xlu0 %v547
      %v601 = vpop.xlane.xlu0 %600
      %602 = vmax.xlane.f32.xlu0 %v552
      %v603 = vpop.xlane.xlu0 %602
      %604 = vmax.xlane.f32.xlu0 %v555
      %v605 = vpop.xlane.xlu0 %604
      %606 = vmax.xlane.f32.xlu0 %v560
      %v607 = vpop.xlane.xlu0 %606
      %608 = vmax.xlane.f32.xlu0 %v563
      %v609 = vpop.xlane.xlu0 %608
      %610 = vmax.xlane.f32.xlu0 %v568
      %v611 = vpop.xlane.xlu0 %610
      %612 = vmax.xlane.f32.xlu0 %v571
      %v613 = vpop.xlane.xlu0 %612
      %614 = vmax.xlane.f32.xlu0 %v576
      %v615 = vpop.xlane.xlu0 %614
      %616 = vmax.xlane.f32.xlu0 %v579
      %v617 = vpop.xlane.xlu0 %616
      %618 = vmax.xlane.f32.xlu0 %v584
      %v619 = vpop.xlane.xlu0 %618
      %620 = vmax.xlane.f32.xlu0 %v587
      %v621 = vpop.xlane.xlu0 %620
      %v622 = vsub.f32 %v528, %v591
      %v623 = vsub.f32 %v531, %v593
      %v624 = vsub.f32 %v536, %v595
      %v625 = vsub.f32 %v539, %v597
      %v626 = vsub.f32 %v544, %v599
      %v627 = vsub.f32 %v547, %v601
      %v628 = vsub.f32 %v552, %v603
      %v629 = vsub.f32 %v555, %v605
      %v630 = vsub.f32 %v560, %v607
      %v631 = vsub.f32 %v563, %v609
      %v632 = vsub.f32 %v568, %v611
      %v633 = vsub.f32 %v571, %v613
      %v634 = vsub.f32 %v576, %v615
      %v635 = vsub.f32 %v579, %v617
      %v636 = vsub.f32 %v584, %v619
      %v637 = vsub.f32 %v587, %v621
      %v638 = vmul.f32 %v622, 1.442695
      %v639 = vpow.pop %v638
      %v640 = vmul.f32 %v623, 1.442695
      %v641 = vpow.pop %v640
      %v642 = vmul.f32 %v624, 1.442695
      %v643 = vpow.pop %v642
      %v644 = vmul.f32 %v625, 1.442695
      %v645 = vpow.pop %v644
      %v646 = vmul.f32 %v626, 1.442695
      %v647 = vpow.pop %v646
      %v648 = vmul.f32 %v627, 1.442695
      %v649 = vpow.pop %v648
      %v650 = vmul.f32 %v628, 1.442695
      %v651 = vpow.pop %v650
      %v652 = vmul.f32 %v629, 1.442695
      %v653 = vpow.pop %v652
      %v654 = vmul.f32 %v630, 1.442695
      %v655 = vpow.pop %v654
      %v656 = vmul.f32 %v631, 1.442695
      %v657 = vpow.pop %v656
      %v658 = vmul.f32 %v632, 1.442695
      %v659 = vpow.pop %v658
      %v660 = vmul.f32 %v633, 1.442695
      %v661 = vpow.pop %v660
      %v662 = vmul.f32 %v634, 1.442695
      %v663 = vpow.pop %v662
      %v664 = vmul.f32 %v635, 1.442695
      %v665 = vpow.pop %v664
      %v666 = vmul.f32 %v636, 1.442695
      %v667 = vpow.pop %v666
      %v668 = vmul.f32 %v637, 1.442695
      %v669 = vpow.pop %v668
      %670 = vadd.xlane.f32.xlu0 %v639
      %v671 = vpop.xlane.xlu0 %670
      %672 = vadd.xlane.f32.xlu0 %v641
      %v673 = vpop.xlane.xlu0 %672
      %674 = vadd.xlane.f32.xlu0 %v643
      %v675 = vpop.xlane.xlu0 %674
      %676 = vadd.xlane.f32.xlu0 %v645
      %v677 = vpop.xlane.xlu0 %676
      %678 = vadd.xlane.f32.xlu0 %v647
      %v679 = vpop.xlane.xlu0 %678
      %680 = vadd.xlane.f32.xlu0 %v649
      %v681 = vpop.xlane.xlu0 %680
      %682 = vadd.xlane.f32.xlu0 %v651
      %v683 = vpop.xlane.xlu0 %682
      %684 = vadd.xlane.f32.xlu0 %v653
      %v685 = vpop.xlane.xlu0 %684
      %686 = vadd.xlane.f32.xlu0 %v655
      %v687 = vpop.xlane.xlu0 %686
      %688 = vadd.xlane.f32.xlu0 %v657
      %v689 = vpop.xlane.xlu0 %688
      %690 = vadd.xlane.f32.xlu0 %v659
      %v691 = vpop.xlane.xlu0 %690
      %692 = vadd.xlane.f32.xlu0 %v661
      %v693 = vpop.xlane.xlu0 %692
      %694 = vadd.xlane.f32.xlu0 %v663
      %v695 = vpop.xlane.xlu0 %694
      %696 = vadd.xlane.f32.xlu0 %v665
      %v697 = vpop.xlane.xlu0 %696
      %698 = vadd.xlane.f32.xlu0 %v667
      %v699 = vpop.xlane.xlu0 %698
      %700 = vadd.xlane.f32.xlu0 %v669
      %v701 = vpop.xlane.xlu0 %700
      %v702 = vrcp.pop %v671
      %v703 = vmul.f32 %v639, %v702
      %v704 = vrcp.pop %v673
      %v705 = vmul.f32 %v641, %v704
      %v706 = vrcp.pop %v675
      %v707 = vmul.f32 %v643, %v706
      %v708 = vrcp.pop %v677
      %v709 = vmul.f32 %v645, %v708
      %v710 = vrcp.pop %v679
      %v711 = vmul.f32 %v647, %v710
      %v712 = vrcp.pop %v681
      %v713 = vmul.f32 %v649, %v712
      %v714 = vrcp.pop %v683
      %v715 = vmul.f32 %v651, %v714
      %v716 = vrcp.pop %v685
      %v717 = vmul.f32 %v653, %v716
      %v718 = vrcp.pop %v687
      %v719 = vmul.f32 %v655, %v718
      %v720 = vrcp.pop %v689
      %v721 = vmul.f32 %v657, %v720
      %v722 = vrcp.pop %v691
      %v723 = vmul.f32 %v659, %v722
      %v724 = vrcp.pop %v693
      %v725 = vmul.f32 %v661, %v724
      %v726 = vrcp.pop %v695
      %v727 = vmul.f32 %v663, %v726
      %v728 = vrcp.pop %v697
      %v729 = vmul.f32 %v665, %v728
      %v730 = vrcp.pop %v699
      %v731 = vmul.f32 %v667, %v730
      %v732 = vrcp.pop %v701
      %v733 = vmul.f32 %v669, %v732
      %734 = vst [vmem:[%s226] sm:$0xff] %v703
      %735 = vst [vmem:[%s226 + $0x8] sm:$0xff] %v705
      %736 = vst [vmem:[%s226 + $0x10] sm:$0xff] %v707
      %737 = vst [vmem:[%s226 + $0x18] sm:$0xff] %v709
      %738 = vst [vmem:[%s226 + $0x20] sm:$0xff] %v711
      %739 = vst [vmem:[%s226 + $0x28] sm:$0xff] %v713
      %740 = vst [vmem:[%s226 + $0x30] sm:$0xff] %v715
      %741 = vst [vmem:[%s226 + $0x38] sm:$0xff] %v717
      %742 = vst [vmem:[%s226 + $0x40] sm:$0xff] %v719
      %743 = vst [vmem:[%s226 + $0x48] sm:$0xff] %v721
      %744 = vst [vmem:[%s226 + $0x50] sm:$0xff] %v723
      %745 = vst [vmem:[%s226 + $0x58] sm:$0xff] %v725
      %746 = vst [vmem:[%s226 + $0x60] sm:$0xff] %v727
      %747 = vst [vmem:[%s226 + $0x68] sm:$0xff] %v729
      %748 = vst [vmem:[%s226 + $0x70] sm:$0xff] %v731
      %749 = vst [vmem:[%s226 + $0x78] sm:$0xff] %v733
      %s750 = smul.u32 16, %s16
      %p751 = scmp.lt.s32.totalorder %s750, 31
      %s752 = scalar_select %p751, %s750, 31
      %s753 = smul.addr %s752, 8
      %s754 = scalar_lea.vmem %s5, %s753
      // Predicated region
      $region41: #{forward.1} parent=39 // pred_check
        %p755 = pneg %p144
      $region42: #{forward.1} parent=39 // pred_check_branch
        %757 = sbr.rel (%p755) target = $region44
      $region43: #{forward.1} parent=39 // pred_region
        %s758 = smul.u32 16, %s16
      $region44: #{forward.1} parent=39 // pred_fallthru
        _
    $region40: #{forward.1} parent=5 // pred_fallthru
      _
    %p759 = scmp.le.s32.totalorder 2, %s11
    // Predicated region
    $region45: #{forward.1} parent=5 // pred_check
      %p760 = pneg %p759
    $region46: #{forward.1} parent=5 // pred_check_branch
      %762 = sbr.rel (%p760) target = $region48
    $region47: #{forward.1} parent=5 // pred_region
      %s763 = ssub.s32 %s11, 2
      // Predicated region
      $region49: #{forward.1} parent=47 // pred_check
        %p764 = pneg %p150
      $region50: #{forward.1} parent=47 // pred_check_branch
        %766 = sbr.rel (%p764) target = $region52
      $region51: #{forward.1} parent=47 // pred_region
        %s767 = smul.u32 16, %s17
        %p768 = scmp.lt.s32.totalorder %s767, 31
        %s769 = scalar_select %p768, %s767, 31
        %s770 = smul.addr %s769, 8
        %s771 = scalar_lea.vmem %s5, %s770
      $region52: #{forward.1} parent=47 // pred_fallthru
        _
    $region48: #{forward.1} parent=5 // pred_fallthru
      _
  $region6: #{forward.1} parent=0 // loop_footer
    %s15 = sadd.s32 1, %s11
  $region7: #{forward.1} parent=0 // loop_footer_branch
    %10 = sbr.rel target = $region3
  $region8: #{forward.1} parent=0 // loop_exit
    _

</llo_original>
